<compile_context>
chip_gen: v5e
topology: v5e:2x2
jax: 0.10.0
libtpu: 0.0.40
codegen_flags: <defaults>
</compile_context>

<pallas_src>
import functools

import jax
import jax.numpy as jnp
from jax import lax
from jax.experimental import pallas as pl
from jax.experimental.pallas import tpu as pltpu


def _to_tensor_kernel(packed_ref, out_ref, *, shifts):
    """packed_ref: (TH, W) uint32 — 4 packed uint8 channels per pixel.
       out_ref:    (C, TH, W) float32 — one dense channel plane per write."""
    x = packed_ref[...]                                   # (TH, W) uint32
    scale = jnp.float32(1.0 / 255.0)
    for ch, sh in enumerate(shifts):                      # static unroll, C <= 4
        byte = (x >> jnp.uint32(sh)) & jnp.uint32(0xFF)   # VPU only, no XLU
        out_ref[ch, :, :] = byte.astype(jnp.float32) * scale


@functools.lru_cache(maxsize=1)
def _byte0_is_lsb() -> bool:
    # Robustness: detect how bitcast_convert_type packs bytes (little-endian on
    # TPU/XLA, but verify once so the shift order can never be silently wrong).
    probe = lax.bitcast_convert_type(jnp.array([1, 0, 0, 0], jnp.uint8), jnp.uint32)
    return int(probe) == 1


def _pick_tile_h(h: int, w: int, c: int, target_out_bytes: int = 2 << 20) -> int:
    """Largest multiple-of-8 row tile whose f32 output block is ~target bytes."""
    th = target_out_bytes // max(1, c * w * 4)
    th = max(8, (th // 8) * 8)
    if th >= h:
        return h
    if h % th != 0:
        # Prefer an exact divisor (avoids a masked edge block) when one exists.
        for cand in range(th, 7, -8):
            if h % cand == 0:
                return cand
    return th  # uneven last block handled by Pallas masking


def to_tensor(img: jax.Array) -> jax.Array:
    """img: (h, w, c) uint8 -> (1, c, h, w) float32 in [0, 1]. Supports c <= 4."""
    h, w, c = img.shape
    if c > 4:
        # TODO(synk): c > 4 would need channel-group packing; not an image case.
        raise NotImplementedError("to_tensor kernel supports c <= 4 channels")
    assert img.dtype == jnp.uint8, img.dtype

    # Wrapper-side layout glue (no math): pad channels to 4 and reinterpret each
    # pixel's 4 bytes as one uint32 so the kernel sees a lane-dense (h, w) slab
    # instead of a 3/4-lane-wide channels-last layout.
    if c < 4:
        img = jnp.pad(img, ((0, 0), (0, 0), (0, 4 - c)))
    packed = lax.bitcast_convert_type(img, jnp.uint32)    # (h, w) uint32

    if _byte0_is_lsb():
        shifts = tuple(8 * ch for ch in range(c))
    else:
        shifts = tuple(8 * (3 - ch) for ch in range(c))

    th = _pick_tile_h(h, w, c)
    grid = (pl.cdiv(h, th),)

    chw = pl.pallas_call(
        functools.partial(_to_tensor_kernel, shifts=shifts),
        out_shape=jax.ShapeDtypeStruct((c, h, w), jnp.float32),
        grid=grid,
        in_specs=[pl.BlockSpec((th, w), lambda i: (i, 0))],
        out_specs=pl.BlockSpec((c, th, w), lambda i: (0, i, 0)),
        compiler_params=pltpu.CompilerParams(
            dimension_semantics=("parallel",)),
    )(packed)

    # Leading batch dim is pure reshape glue (matches the (1, c, h, w) spec).
    return chw[None, ...]


if __name__ == "__main__":
    key = jax.random.PRNGKey(0)

    def reference(img):
        return (jnp.transpose(img.astype(jnp.float32), (2, 0, 1)) / 255.0)[None, ...]

    # Exercise both the RGBA (c=4, direct pack) and RGB (c=3, padded) paths.
    for (h, w, c) in [(16, 16, 4), (16, 16, 3)]:
        key, sub = jax.random.split(key)
        img = jax.random.randint(sub, (h, w, c), 0, 256, dtype=jnp.int32).astype(jnp.uint8)

        out = jax.block_until_ready(to_tensor(img))
        ref = reference(img)

        assert out.shape == (1, c, h, w), out.shape
        assert out.dtype == jnp.float32, out.dtype
        assert jnp.allclose(out, ref, atol=1e-6), float(jnp.max(jnp.abs(out - ref)))

    print("KERNEL_OK")
</pallas_src>

<mosaic_0001>
module attributes {stable_mosaic.version = 11 : i64} {
  func.func @_to_tensor_kernel(%arg0: i32, %arg1: memref<16x16xi32, #tpu.memory_space<vmem>>, %arg2: memref<4x16x16xf32, #tpu.memory_space<vmem>>) attributes {dimension_semantics = [#tpu.dimension_semantics<parallel>], iteration_bounds = array<i64: 1>, scalar_prefetch = 0 : i64, scratch_operands = 0 : i64, tpu.core_type = #tpu.core_type<tc>, window_params = [{transform_indices = @transform_0, window_bounds = array<i64: 16, 16>}, {transform_indices = @transform_1, window_bounds = array<i64: 4, 16, 16>}]} {
    %c0 = arith.constant 0 : index
    %c0_0 = arith.constant 0 : index
    %0 = vector.load %arg1[%c0, %c0_0] : memref<16x16xi32, #tpu.memory_space<vmem>>, vector<16x16xi32>
    %c0_i32 = arith.constant 0 : i32
    %1 = vector.broadcast %c0_i32 : i32 to vector<16x16xi32>
    %2 = arith.shrui %0, %1 : vector<16x16xi32>
    %c255_i32 = arith.constant 255 : i32
    %3 = vector.broadcast %c255_i32 : i32 to vector<16x16xi32>
    %4 = arith.andi %2, %3 : vector<16x16xi32>
    %5 = arith.uitofp %4 : vector<16x16xi32> to vector<16x16xf32>
    %cst = arith.constant 0.00392156886 : f32
    %6 = vector.broadcast %cst : f32 to vector<16x16xf32>
    %7 = arith.mulf %5, %6 : vector<16x16xf32>
    %c0_1 = arith.constant 0 : index
    %c0_2 = arith.constant 0 : index
    %c0_3 = arith.constant 0 : index
    %8 = vector.load %arg2[%c0_1, %c0_2, %c0_3] : memref<4x16x16xf32, #tpu.memory_space<vmem>>, vector<1x16x16xf32>
    %9 = vector.shape_cast %8 : vector<1x16x16xf32> to vector<16x16xf32>
    %10 = vector.shape_cast %7 : vector<16x16xf32> to vector<1x16x16xf32>
    tpu.vector_store %arg2[%c0_1, %c0_2, %c0_3], %10 {strides = array<i32>} : memref<4x16x16xf32, #tpu.memory_space<vmem>>, vector<1x16x16xf32>,
    %c8_i32 = arith.constant 8 : i32
    %11 = vector.broadcast %c8_i32 : i32 to vector<16x16xi32>
    %12 = arith.shrui %0, %11 : vector<16x16xi32>
    %c255_i32_4 = arith.constant 255 : i32
    %13 = vector.broadcast %c255_i32_4 : i32 to vector<16x16xi32>
    %14 = arith.andi %12, %13 : vector<16x16xi32>
    %15 = arith.uitofp %14 : vector<16x16xi32> to vector<16x16xf32>
    %cst_5 = arith.constant 0.00392156886 : f32
    %16 = vector.broadcast %cst_5 : f32 to vector<16x16xf32>
    %17 = arith.mulf %15, %16 : vector<16x16xf32>
    %c1 = arith.constant 1 : index
    %c0_6 = arith.constant 0 : index
    %c0_7 = arith.constant 0 : index
    %18 = vector.load %arg2[%c1, %c0_6, %c0_7] : memref<4x16x16xf32, #tpu.memory_space<vmem>>, vector<1x16x16xf32>
    %19 = vector.shape_cast %18 : vector<1x16x16xf32> to vector<16x16xf32>
    %20 = vector.shape_cast %17 : vector<16x16xf32> to vector<1x16x16xf32>
    tpu.vector_store %arg2[%c1, %c0_6, %c0_7], %20 {strides = array<i32>} : memref<4x16x16xf32, #tpu.memory_space<vmem>>, vector<1x16x16xf32>,
    %c16_i32 = arith.constant 16 : i32
    %21 = vector.broadcast %c16_i32 : i32 to vector<16x16xi32>
    %22 = arith.shrui %0, %21 : vector<16x16xi32>
    %c255_i32_8 = arith.constant 255 : i32
    %23 = vector.broadcast %c255_i32_8 : i32 to vector<16x16xi32>
    %24 = arith.andi %22, %23 : vector<16x16xi32>
    %25 = arith.uitofp %24 : vector<16x16xi32> to vector<16x16xf32>
    %cst_9 = arith.constant 0.00392156886 : f32
    %26 = vector.broadcast %cst_9 : f32 to vector<16x16xf32>
    %27 = arith.mulf %25, %26 : vector<16x16xf32>
    %c2 = arith.constant 2 : index
    %c0_10 = arith.constant 0 : index
    %c0_11 = arith.constant 0 : index
    %28 = vector.load %arg2[%c2, %c0_10, %c0_11] : memref<4x16x16xf32, #tpu.memory_space<vmem>>, vector<1x16x16xf32>
    %29 = vector.shape_cast %28 : vector<1x16x16xf32> to vector<16x16xf32>
    %30 = vector.shape_cast %27 : vector<16x16xf32> to vector<1x16x16xf32>
    tpu.vector_store %arg2[%c2, %c0_10, %c0_11], %30 {strides = array<i32>} : memref<4x16x16xf32, #tpu.memory_space<vmem>>, vector<1x16x16xf32>,
    %c24_i32 = arith.constant 24 : i32
    %31 = vector.broadcast %c24_i32 : i32 to vector<16x16xi32>
    %32 = arith.shrui %0, %31 : vector<16x16xi32>
    %c255_i32_12 = arith.constant 255 : i32
    %33 = vector.broadcast %c255_i32_12 : i32 to vector<16x16xi32>
    %34 = arith.andi %32, %33 : vector<16x16xi32>
    %35 = arith.uitofp %34 : vector<16x16xi32> to vector<16x16xf32>
    %cst_13 = arith.constant 0.00392156886 : f32
    %36 = vector.broadcast %cst_13 : f32 to vector<16x16xf32>
    %37 = arith.mulf %35, %36 : vector<16x16xf32>
    %c3 = arith.constant 3 : index
    %c0_14 = arith.constant 0 : index
    %c0_15 = arith.constant 0 : index
    %38 = vector.load %arg2[%c3, %c0_14, %c0_15] : memref<4x16x16xf32, #tpu.memory_space<vmem>>, vector<1x16x16xf32>
    %39 = vector.shape_cast %38 : vector<1x16x16xf32> to vector<16x16xf32>
    %40 = vector.shape_cast %37 : vector<16x16xf32> to vector<1x16x16xf32>
    tpu.vector_store %arg2[%c3, %c0_14, %c0_15], %40 {strides = array<i32>} : memref<4x16x16xf32, #tpu.memory_space<vmem>>, vector<1x16x16xf32>,
    return
  }
  func.func @transform_0(%arg0: i32) -> (i32, i32) {
    %c0_i32 = arith.constant 0 : i32
    %c0_i32_0 = arith.constant 0 : i32
    return %arg0, %c0_i32 : i32, i32
  }
  func.func @transform_1(%arg0: i32) -> (i32, i32, i32) {
    %c0_i32 = arith.constant 0 : i32
    %c0_i32_0 = arith.constant 0 : i32
    %c0_i32_1 = arith.constant 0 : i32
    return %c0_i32, %arg0, %c0_i32_0 : i32, i32, i32
  }
}

</mosaic_0001>

<llo_original>
// kernel: tpu_custom_call.1
$region0: #{tpu_custom_call.1}
  #allocation0 [shape = 'u32[]', space=smem, size = 0x4, offset = 0x4, fixed_abs, tag = 'smem constant byte address 0x4 - core index']
  #allocation1 [shape = 'u32[72,128]{1,0:T(1,128)}', space=vmem, size = 0x9000, scoped, tag = 'internal scratch']
  %s0 = inlined_call_operand.hbm [shape: u32[16,16], index: 0, kind: input, shape index: {}]
  %s1 = inlined_call_operand.hbm [shape: f32[4,16,16], index: 1, kind: output, shape index: {}]
  %s2 = sld [smem:[#allocation0]]
  $region18: #{tpu_custom_call.1} parent=0
    _
  %s4 = ssub.s32 1, %s2
  %s5 = scalar_select 0, %s4, %s2
  $region1: #{tpu_custom_call.1} parent=0
    #allocation2 [shape = 'u8[8192]{0}', space=vmem, size = 0x2000, scoped, tag = 'input window, operand 0, single buffered']
    #allocation3 [shape = 's32[1]{0}', space=sflag, size = 0x4, scoped, tag = 'scoped memory for tpu_custom_call.1']
    #allocation4 [shape = 's32[1]{0}', space=sflag, size = 0x4, scoped, tag = 'scoped memory for tpu_custom_call.1']
    #allocation5 [shape = 'u8[32768]{0}', space=vmem, size = 0x8000, scoped, tag = 'output window, operand 0, single buffered']
    %6 = vsyncpa [#allocation3], 0
    %7 = vsyncpa [#allocation4], 0
    // Predicated region
    $region2: #{tpu_custom_call.1} parent=1 // pred_check
      _
    $region3: #{tpu_custom_call.1} parent=1 // pred_check_branch
      %9 = sbr.rel (0) target = $region5
    $region4: #{tpu_custom_call.1} parent=1 // pred_region
      %11 = vsyncadd [#allocation3], 0
      %s12 = sshll.u32 %s0, 4
      %s13 = int_to_ptr.hbm [resolvable:$true] %s12
      %s14 = sshll.u32 [#allocation2], 4
      %s15 = int_to_ptr.vmem [resolvable:$true] %s14
      %20 = dma.hbm_to_vmem [thread:$0]  %s13, 256, %s15, [#allocation3], 128, 128, 8
    $region5: #{tpu_custom_call.1} parent=1 // pred_fallthru
      _
    // Predicated region
    $region6: #{tpu_custom_call.1} parent=1 // pred_check
      _
    $region7: #{tpu_custom_call.1} parent=1 // pred_check_branch
      %22 = sbr.rel (0) target = $region9
    $region8: #{tpu_custom_call.1} parent=1 // pred_region
      %24 = dma.done [#allocation3], 256
    $region9: #{tpu_custom_call.1} parent=1 // pred_fallthru
      _
    %v25 = vld [vmem:[#allocation2] sm:$0xff]
    %v26 = vld [vmem:[#allocation2 + $0x8] sm:$0xff]
    %v27 = vand.u32 %v25, 255
    %v28 = vand.u32 %v26, 255
    %v29 = vshrl.u32 %v27, 16
    %v30 = vand.u32 %v27, 65535
    %v31 = vcvt.s32.f32 %v29
    %v32 = vmul.f32 %v31, 65536.0
    %v33 = vcvt.s32.f32 %v30
    %v34 = vadd.f32 %v32, %v33
    %v35 = vshrl.u32 %v28, 16
    %v36 = vand.u32 %v28, 65535
    %v37 = vcvt.s32.f32 %v35
    %v38 = vmul.f32 %v37, 65536.0
    %v39 = vcvt.s32.f32 %v36
    %v40 = vadd.f32 %v38, %v39
    %v41 = vmul.f32 %v34, 0.003921569
    %v42 = vmul.f32 %v40, 0.003921569
    %vm43 = vcmask 130048
    %44 = vst.msk [vmem:[#allocation5] sm:$0xff] %vm43, %v41
    %45 = vst.msk [vmem:[#allocation5 + $0x8] sm:$0xff] %vm43, %v42
    %v46 = vshrl.u32 %v25, 8
    %v47 = vshrl.u32 %v26, 8
    %v48 = vand.u32 %v46, 255
    %v49 = vand.u32 %v47, 255
    %v50 = vshrl.u32 %v48, 16
    %v51 = vand.u32 %v48, 65535
    %v52 = vcvt.s32.f32 %v50
    %v53 = vmul.f32 %v52, 65536.0
    %v54 = vcvt.s32.f32 %v51
    %v55 = vadd.f32 %v53, %v54
    %v56 = vshrl.u32 %v49, 16
    %v57 = vand.u32 %v49, 65535
    %v58 = vcvt.s32.f32 %v56
    %v59 = vmul.f32 %v58, 65536.0
    %v60 = vcvt.s32.f32 %v57
    %v61 = vadd.f32 %v59, %v60
    %v62 = vmul.f32 %v55, 0.003921569
    %v63 = vmul.f32 %v61, 0.003921569
    %s64 = scalar_lea.vmem [#allocation5], 16
    %65 = vst.msk [vmem:[%s64] sm:$0xff] %vm43, %v62
    %66 = vst.msk [vmem:[%s64 + $0x8] sm:$0xff] %vm43, %v63
    %v67 = vshrl.u32 %v25, 16
    %v68 = vshrl.u32 %v26, 16
    %v69 = vand.u32 %v67, 255
    %v70 = vand.u32 %v68, 255
    %v71 = vshrl.u32 %v69, 16
    %v72 = vand.u32 %v69, 65535
    %v73 = vcvt.s32.f32 %v71
    %v74 = vmul.f32 %v73, 65536.0
    %v75 = vcvt.s32.f32 %v72
    %v76 = vadd.f32 %v74, %v75
    %v77 = vshrl.u32 %v70, 16
    %v78 = vand.u32 %v70, 65535
    %v79 = vcvt.s32.f32 %v77
    %v80 = vmul.f32 %v79, 65536.0
    %v81 = vcvt.s32.f32 %v78
    %v82 = vadd.f32 %v80, %v81
    %v83 = vmul.f32 %v76, 0.003921569
    %v84 = vmul.f32 %v82, 0.003921569
    %s85 = scalar_lea.vmem [#allocation5], 32
    %86 = vst.msk [vmem:[%s85] sm:$0xff] %vm43, %v83
    %87 = vst.msk [vmem:[%s85 + $0x8] sm:$0xff] %vm43, %v84
    %v88 = vshrl.u32 %v25, 24
    %v89 = vshrl.u32 %v26, 24
    %v90 = vand.u32 %v88, 255
    %v91 = vand.u32 %v89, 255
    %v92 = vshrl.u32 %v90, 16
    %v93 = vand.u32 %v90, 65535
    %v94 = vcvt.s32.f32 %v92
    %v95 = vmul.f32 %v94, 65536.0
    %v96 = vcvt.s32.f32 %v93
    %v97 = vadd.f32 %v95, %v96
    %v98 = vshrl.u32 %v91, 16
    %v99 = vand.u32 %v91, 65535
    %v100 = vcvt.s32.f32 %v98
    %v101 = vmul.f32 %v100, 65536.0
    %v102 = vcvt.s32.f32 %v99
    %v103 = vadd.f32 %v101, %v102
    %v104 = vmul.f32 %v97, 0.003921569
    %v105 = vmul.f32 %v103, 0.003921569
    %s106 = scalar_lea.vmem [#allocation5], 48
    %107 = vst.msk [vmem:[%s106] sm:$0xff] %vm43, %v104
    %108 = vst.msk [vmem:[%s106 + $0x8] sm:$0xff] %vm43, %v105
    // Predicated region
    $region10: #{tpu_custom_call.1} parent=1 // pred_check
      _
    $region11: #{tpu_custom_call.1} parent=1 // pred_check_branch
      %110 = sbr.rel (0) target = $region13
    $region12: #{tpu_custom_call.1} parent=1 // pred_region
      %112 = vsyncadd [#allocation4], 0
      %s113 = sshll.u32 [#allocation5], 4
      %s114 = int_to_ptr.vmem [resolvable:$true] %s113
      %s115 = sshll.u32 %s1, 4
      %s116 = int_to_ptr.hbm [resolvable:$true] %s115
      %121 = dma.vmem_to_hbm [thread:$0]  %s114, 1024, %s116, [#allocation4], 128, 128, 8
    $region13: #{tpu_custom_call.1} parent=1 // pred_fallthru
      _
    // Predicated region
    $region14: #{tpu_custom_call.1} parent=1 // pred_check
      _
    $region15: #{tpu_custom_call.1} parent=1 // pred_check_branch
      %123 = sbr.rel (0) target = $region17
    $region16: #{tpu_custom_call.1} parent=1 // pred_region
      %125 = dma.done [#allocation4], 1024
    $region17: #{tpu_custom_call.1} parent=1 // pred_fallthru
      _
    %126 = vsyncpa [#allocation3], 1
    %127 = vsyncpa [#allocation4], 1

</llo_original>
